<compile_context>
chip_gen: v7x
topology: tpu7x:2x2x1
jax: 0.10.0
libtpu: 0.0.40
codegen_flags: <defaults>
</compile_context>

<pallas_src>
import functools

import jax
import jax.numpy as jnp
from jax.experimental import pallas as pl
from jax.experimental.pallas import tpu as pltpu

SUBLANE = 8  # f32 sublane height; the batch is padded only to this.


def _round_up(n, m):
    return ((n + m - 1) // m) * m


def dqn_kernel(x_ref, w1_ref, b1_ref, w2_ref, b2_ref, w3_ref, b3_ref, out_ref):
    """One batch block: two hidden ReLU layers + linear head, all in VMEM.

    Matmul inputs are cast to bf16 (MXU-native on v5e/v6e/v7x) with f32
    accumulation; bias add + ReLU run in f32 on the VPU.
    """
    x = x_ref[...].astype(jnp.bfloat16)
    h1 = jnp.dot(x, w1_ref[...], preferred_element_type=jnp.float32) + b1_ref[...]
    h1 = jnp.maximum(h1, 0.0)                                   # F.relu(self.fc1(x))
    h2 = (jnp.dot(h1.astype(jnp.bfloat16), w2_ref[...],
                  preferred_element_type=jnp.float32) + b2_ref[...])
    h2 = jnp.maximum(h2, 0.0)                                   # F.relu(self.fc2(x))
    q = (jnp.dot(h2.astype(jnp.bfloat16), w3_ref[...],
                 preferred_element_type=jnp.float32) + b3_ref[...])
    out_ref[...] = q.astype(out_ref.dtype)                      # self.out(x), no activation


@functools.partial(jax.jit, static_argnames=("n_actions", "batch_tile"))
def dqn_forward(x, params, *, n_actions, batch_tile=None):
    """Forward pass. x: (B, in_dim) f32; params: bf16 (in, out) weights + f32 biases."""
    w1, b1, w2, b2, w3, b3 = params
    B, in_dim = x.shape
    fc1 = w1.shape[1]
    fc2 = w2.shape[1]

    # Default: single grid step over the whole (sublane-padded) batch.
    # For large replay batches pass batch_tile (e.g. 512-2048) to tile the
    # batch over a "parallel" grid axis instead.
    if batch_tile is None:
        tb = _round_up(max(B, 1), SUBLANE)
    else:
        tb = _round_up(min(batch_tile, max(B, 1)), SUBLANE)
    b_pad = _round_up(max(B, 1), tb)
    n_tiles = b_pad // tb

    x_p = x if b_pad == B else jnp.pad(x, ((0, b_pad - B), (0, 0)))

    def const_spec(arr):
        # Weights/biases: whole array, same block for every grid step ->
        # DMA'd once and VMEM-resident across the grid. (With n_tiles == 1 the
        # second pipeline buffer is moot; pl.Buffered(1) could reclaim it when
        # batch tiling is enabled, but the ~6 KiB of real weights make that a
        # non-issue for VMEM.)
        return pl.BlockSpec(arr.shape, lambda i: (0,) * arr.ndim)

    # Advisory cost estimate on *logical* (unpadded) sizes.
    flops = 2 * B * (in_dim * fc1 + fc1 * fc2 + fc2 * n_actions)
    bytes_accessed = (
        x.dtype.itemsize * B * in_dim
        + w1.dtype.itemsize * (w1.size + w2.size + w3.size)
        + b1.dtype.itemsize * (b1.size + b2.size + b3.size)
        + 4 * B * n_actions
    )

    q = pl.pallas_call(
        dqn_kernel,
        out_shape=jax.ShapeDtypeStruct((b_pad, n_actions), jnp.float32),
        grid=(n_tiles,),
        in_specs=[
            pl.BlockSpec((tb, in_dim), lambda i: (i, 0)),       # x batch block (B, 16)
            const_spec(w1), const_spec(b1),
            const_spec(w2), const_spec(b2),
            const_spec(w3), const_spec(b3),
        ],
        out_specs=pl.BlockSpec((tb, n_actions), lambda i: (i, 0)),
        compiler_params=pltpu.CompilerParams(
            dimension_semantics=("parallel",) if n_tiles > 1 else ("arbitrary",),
        ),
        cost_estimate=pl.CostEstimate(
            flops=flops, transcendentals=0, bytes_accessed=bytes_accessed
        ),
    )(x_p, w1, b1, w2, b2, w3, b3)

    return q if b_pad == B else q[:B]


def init_params(key, in_dim, fc1, fc2, n_actions):
    """PyTorch nn.Linear init: U(-1/sqrt(fan_in), +1/sqrt(fan_in)); weights (in, out)."""
    keys = jax.random.split(key, 6)

    def layer(kw, kb, fan_in, fan_out):
        bound = 1.0 / jnp.sqrt(float(fan_in))
        w = jax.random.uniform(kw, (fan_in, fan_out), jnp.float32, -bound, bound)
        b = jax.random.uniform(kb, (1, fan_out), jnp.float32, -bound, bound)
        return w, b

    w1, b1 = layer(keys[0], keys[1], in_dim, fc1)
    w2, b2 = layer(keys[2], keys[3], fc1, fc2)
    w3, b3 = layer(keys[4], keys[5], fc2, n_actions)
    return (w1, b1, w2, b2, w3, b3)


def prep_params(params):
    """Cast weights to bf16 (halves weight DMA, MXU-native); keep biases f32."""
    w1, b1, w2, b2, w3, b3 = params
    return (w1.astype(jnp.bfloat16), b1,
            w2.astype(jnp.bfloat16), b2,
            w3.astype(jnp.bfloat16), b3)


def dqn_reference(x, params):
    """Pure-JAX reference with the same numerics as the kernel:
    bf16 matmul inputs, f32 accumulation, f32 bias + ReLU."""
    w1, b1, w2, b2, w3, b3 = params

    def lin(h, w, b):
        return jnp.dot(h.astype(jnp.bfloat16), w.astype(jnp.bfloat16),
                       preferred_element_type=jnp.float32) + b

    h1 = jax.nn.relu(lin(x, w1, b1))
    h2 = jax.nn.relu(lin(h1, w2, b2))
    return lin(h2, w3, b3)


if __name__ == "__main__":
    # Shapes consistent with DeepQNetwork(lr, input_dims=(16,), n_actions=8, fc1=32, fc2=32).
    # Batch = 32 (multiple of 8 -> no batch padding, no output slice, single grid step).
    B, IN_DIM, FC1, FC2, N_ACTIONS = 32, 16, 32, 32, 8

    key = jax.random.PRNGKey(0)
    k_x, k_p = jax.random.split(key)
    x = jax.random.normal(k_x, (B, IN_DIM), jnp.float32)

    params = init_params(k_p, IN_DIM, FC1, FC2, N_ACTIONS)
    bf16_params = prep_params(params)

    q = dqn_forward(x, bf16_params, n_actions=N_ACTIONS)
    q = jax.block_until_ready(q)

    q_ref = dqn_reference(x, params)
    assert q.shape == (B, N_ACTIONS)
    assert jnp.allclose(q, q_ref, atol=2e-3, rtol=2e-3), "mismatch vs reference"

    print("KERNEL_OK")
</pallas_src>

<mosaic_0001>
module attributes {stable_mosaic.version = 11 : i64} {
  func.func @dqn_kernel(%arg0: i32, %arg1: memref<32x16xf32, #tpu.memory_space<vmem>>, %arg2: memref<16x32xbf16, #tpu.memory_space<vmem>>, %arg3: memref<1x32xf32, #tpu.memory_space<vmem>>, %arg4: memref<32x32xbf16, #tpu.memory_space<vmem>>, %arg5: memref<1x32xf32, #tpu.memory_space<vmem>>, %arg6: memref<32x8xbf16, #tpu.memory_space<vmem>>, %arg7: memref<1x8xf32, #tpu.memory_space<vmem>>, %arg8: memref<32x8xf32, #tpu.memory_space<vmem>>) attributes {dimension_semantics = [#tpu.dimension_semantics<arbitrary>], iteration_bounds = array<i64: 1>, scalar_prefetch = 0 : i64, scratch_operands = 0 : i64, tpu.core_type = #tpu.core_type<tc>, window_params = [{transform_indices = @transform_0, window_bounds = array<i64: 32, 16>}, {pipeline_mode = #tpu.pipeline_mode<synchronous>, transform_indices = @transform_1, window_bounds = array<i64: 16, 32>}, {pipeline_mode = #tpu.pipeline_mode<synchronous>, transform_indices = @transform_2, window_bounds = array<i64: 1, 32>}, {pipeline_mode = #tpu.pipeline_mode<synchronous>, transform_indices = @transform_3, window_bounds = array<i64: 32, 32>}, {pipeline_mode = #tpu.pipeline_mode<synchronous>, transform_indices = @transform_4, window_bounds = array<i64: 1, 32>}, {pipeline_mode = #tpu.pipeline_mode<synchronous>, transform_indices = @transform_5, window_bounds = array<i64: 32, 8>}, {pipeline_mode = #tpu.pipeline_mode<synchronous>, transform_indices = @transform_6, window_bounds = array<i64: 1, 8>}, {transform_indices = @transform_7, window_bounds = array<i64: 32, 8>}]} {
    %c0 = arith.constant 0 : index
    %c0_0 = arith.constant 0 : index
    %0 = vector.load %arg1[%c0, %c0_0] : memref<32x16xf32, #tpu.memory_space<vmem>>, vector<32x16xf32>
    %1 = arith.truncf %0 : vector<32x16xf32> to vector<32x16xbf16>
    %c0_1 = arith.constant 0 : index
    %c0_2 = arith.constant 0 : index
    %2 = vector.load %arg2[%c0_1, %c0_2] : memref<16x32xbf16, #tpu.memory_space<vmem>>, vector<16x32xbf16>
    %cst = arith.constant dense<0.000000e+00> : vector<32x32xf32>
    %3 = tpu.matmul %1, %2, %cst {dimension_numbers = #tpu.dot_dimension_numbers<[1], [0], [0], [1], [0, 0, 1, 1], [], []>} : vector<32x16xbf16>, vector<16x32xbf16>, vector<32x32xf32> -> vector<32x32xf32>
    %c0_3 = arith.constant 0 : index
    %c0_4 = arith.constant 0 : index
    %4 = vector.load %arg3[%c0_3, %c0_4] : memref<1x32xf32, #tpu.memory_space<vmem>>, vector<1x32xf32>
    %5 = vector.broadcast %4 : vector<1x32xf32> to vector<32x32xf32>
    %6 = arith.addf %3, %5 : vector<32x32xf32>
    %cst_5 = arith.constant 0.000000e+00 : f32
    %7 = vector.broadcast %cst_5 : f32 to vector<32x32xf32>
    %8 = arith.maximumf %6, %7 : vector<32x32xf32>
    %9 = arith.truncf %8 : vector<32x32xf32> to vector<32x32xbf16>
    %c0_6 = arith.constant 0 : index
    %c0_7 = arith.constant 0 : index
    %10 = vector.load %arg4[%c0_6, %c0_7] : memref<32x32xbf16, #tpu.memory_space<vmem>>, vector<32x32xbf16>
    %cst_8 = arith.constant dense<0.000000e+00> : vector<32x32xf32>
    %11 = tpu.matmul %9, %10, %cst_8 {dimension_numbers = #tpu.dot_dimension_numbers<[1], [0], [0], [1], [0, 0, 1, 1], [], []>} : vector<32x32xbf16>, vector<32x32xbf16>, vector<32x32xf32> -> vector<32x32xf32>
    %c0_9 = arith.constant 0 : index
    %c0_10 = arith.constant 0 : index
    %12 = vector.load %arg5[%c0_9, %c0_10] : memref<1x32xf32, #tpu.memory_space<vmem>>, vector<1x32xf32>
    %13 = vector.broadcast %12 : vector<1x32xf32> to vector<32x32xf32>
    %14 = arith.addf %11, %13 : vector<32x32xf32>
    %cst_11 = arith.constant 0.000000e+00 : f32
    %15 = vector.broadcast %cst_11 : f32 to vector<32x32xf32>
    %16 = arith.maximumf %14, %15 : vector<32x32xf32>
    %17 = arith.truncf %16 : vector<32x32xf32> to vector<32x32xbf16>
    %c0_12 = arith.constant 0 : index
    %c0_13 = arith.constant 0 : index
    %18 = vector.load %arg6[%c0_12, %c0_13] : memref<32x8xbf16, #tpu.memory_space<vmem>>, vector<32x8xbf16>
    %cst_14 = arith.constant dense<0.000000e+00> : vector<32x8xf32>
    %19 = tpu.matmul %17, %18, %cst_14 {dimension_numbers = #tpu.dot_dimension_numbers<[1], [0], [0], [1], [0, 0, 1, 1], [], []>} : vector<32x32xbf16>, vector<32x8xbf16>, vector<32x8xf32> -> vector<32x8xf32>
    %c0_15 = arith.constant 0 : index
    %c0_16 = arith.constant 0 : index
    %20 = vector.load %arg7[%c0_15, %c0_16] : memref<1x8xf32, #tpu.memory_space<vmem>>, vector<1x8xf32>
    %21 = vector.broadcast %20 : vector<1x8xf32> to vector<32x8xf32>
    %22 = arith.addf %19, %21 : vector<32x8xf32>
    %c0_17 = arith.constant 0 : index
    %c0_18 = arith.constant 0 : index
    %23 = vector.load %arg8[%c0_17, %c0_18] : memref<32x8xf32, #tpu.memory_space<vmem>>, vector<32x8xf32>
    tpu.vector_store %arg8[%c0_17, %c0_18], %22 {strides = array<i32>} : memref<32x8xf32, #tpu.memory_space<vmem>>, vector<32x8xf32>,
    return
  }
  func.func @transform_0(%arg0: i32) -> (i32, i32) {
    %c0_i32 = arith.constant 0 : i32
    %c0_i32_0 = arith.constant 0 : i32
    return %arg0, %c0_i32 : i32, i32
  }
  func.func @transform_1(%arg0: i32) -> (i32, i32) {
    %c0_i32 = arith.constant 0 : i32
    %c0_i32_0 = arith.constant 0 : i32
    %c0_i32_1 = arith.constant 0 : i32
    return %c0_i32, %c0_i32_0 : i32, i32
  }
  func.func @transform_2(%arg0: i32) -> (i32, i32) {
    %c0_i32 = arith.constant 0 : i32
    %c0_i32_0 = arith.constant 0 : i32
    %c0_i32_1 = arith.constant 0 : i32
    return %c0_i32, %c0_i32_0 : i32, i32
  }
  func.func @transform_3(%arg0: i32) -> (i32, i32) {
    %c0_i32 = arith.constant 0 : i32
    %c0_i32_0 = arith.constant 0 : i32
    %c0_i32_1 = arith.constant 0 : i32
    return %c0_i32, %c0_i32_0 : i32, i32
  }
  func.func @transform_4(%arg0: i32) -> (i32, i32) {
    %c0_i32 = arith.constant 0 : i32
    %c0_i32_0 = arith.constant 0 : i32
    %c0_i32_1 = arith.constant 0 : i32
    return %c0_i32, %c0_i32_0 : i32, i32
  }
  func.func @transform_5(%arg0: i32) -> (i32, i32) {
    %c0_i32 = arith.constant 0 : i32
    %c0_i32_0 = arith.constant 0 : i32
    %c0_i32_1 = arith.constant 0 : i32
    return %c0_i32, %c0_i32_0 : i32, i32
  }
  func.func @transform_6(%arg0: i32) -> (i32, i32) {
    %c0_i32 = arith.constant 0 : i32
    %c0_i32_0 = arith.constant 0 : i32
    %c0_i32_1 = arith.constant 0 : i32
    return %c0_i32, %c0_i32_0 : i32, i32
  }
  func.func @transform_7(%arg0: i32) -> (i32, i32) {
    %c0_i32 = arith.constant 0 : i32
    %c0_i32_0 = arith.constant 0 : i32
    return %arg0, %c0_i32 : i32, i32
  }
}

</mosaic_0001>

<llo_original>
// kernel: dqn_forward.1
$region0: #{dqn_forward.1}
  #allocation0 [shape = 'u32[]', space=smem, size = 0x4, offset = 0x4, fixed_abs, tag = 'smem constant byte address 0x4 - core index']
  #allocation1 [shape = 'u32[144,128]{1,0:T(1,128)}', space=vmem, size = 0x12000, scoped, tag = 'internal scratch']
  %s0 = inlined_call_operand.vmem [shape: f32[32,16], index: 0, kind: input, shape index: {}]
  %s1 = inlined_call_operand.vmem [shape: bf16[16,32], index: 1, kind: input, shape index: {}]
  %s2 = inlined_call_operand.vmem [shape: f32[1,32], index: 2, kind: input, shape index: {}]
  %s3 = inlined_call_operand.vmem [shape: bf16[32,32], index: 3, kind: input, shape index: {}]
  %s4 = inlined_call_operand.vmem [shape: f32[1,32], index: 4, kind: input, shape index: {}]
  %s5 = inlined_call_operand.vmem [shape: bf16[32,8], index: 5, kind: input, shape index: {}]
  %s6 = inlined_call_operand.vmem [shape: f32[1,8], index: 6, kind: input, shape index: {}]
  %s7 = inlined_call_operand.vmem [shape: f32[32,8], index: 7, kind: output, shape index: {}]
  %s8 = sld [smem:[#allocation0]]
  $region38: #{dqn_forward.1} parent=0
    _
  %s10 = ssub.s32 1, %s8
  %s11 = scalar_select 0, %s10, %s8
  // Predicated region
  $region2: #{dqn_forward.1} parent=0 // pred_check
    _
  $region3: #{dqn_forward.1} parent=0 // pred_check_branch
    %13 = sbr.rel (0) target = $region5
  $region4: #{dqn_forward.1} parent=0 // pred_region
    _
  $region5: #{dqn_forward.1} parent=0 // pred_fallthru
    _
  // Predicated region
  $region6: #{dqn_forward.1} parent=0 // pred_check
    _
  $region7: #{dqn_forward.1} parent=0 // pred_check_branch
    %15 = sbr.rel (0) target = $region9
  $region8: #{dqn_forward.1} parent=0 // pred_region
    _
  $region9: #{dqn_forward.1} parent=0 // pred_fallthru
    _
  // Predicated region
  $region10: #{dqn_forward.1} parent=0 // pred_check
    _
  $region11: #{dqn_forward.1} parent=0 // pred_check_branch
    %17 = sbr.rel (0) target = $region13
  $region12: #{dqn_forward.1} parent=0 // pred_region
    _
  $region13: #{dqn_forward.1} parent=0 // pred_fallthru
    _
  // Predicated region
  $region14: #{dqn_forward.1} parent=0 // pred_check
    _
  $region15: #{dqn_forward.1} parent=0 // pred_check_branch
    %19 = sbr.rel (0) target = $region17
  $region16: #{dqn_forward.1} parent=0 // pred_region
    _
  $region17: #{dqn_forward.1} parent=0 // pred_fallthru
    _
  // Predicated region
  $region18: #{dqn_forward.1} parent=0 // pred_check
    _
  $region19: #{dqn_forward.1} parent=0 // pred_check_branch
    %21 = sbr.rel (0) target = $region21
  $region20: #{dqn_forward.1} parent=0 // pred_region
    _
  $region21: #{dqn_forward.1} parent=0 // pred_fallthru
    _
  // Predicated region
  $region22: #{dqn_forward.1} parent=0 // pred_check
    _
  $region23: #{dqn_forward.1} parent=0 // pred_check_branch
    %23 = sbr.rel (0) target = $region25
  $region24: #{dqn_forward.1} parent=0 // pred_region
    _
  $region25: #{dqn_forward.1} parent=0 // pred_fallthru
    _
  // Predicated region
  $region26: #{dqn_forward.1} parent=0 // pred_check
    _
  $region27: #{dqn_forward.1} parent=0 // pred_check_branch
    %25 = sbr.rel (0) target = $region29
  $region28: #{dqn_forward.1} parent=0 // pred_region
    _
  $region29: #{dqn_forward.1} parent=0 // pred_fallthru
    _
  %v27 = vld [vmem:[%s0] sm:$0xff]
  %v28 = vld [vmem:[%s0 + $0x8] sm:$0xff]
  %v29 = vld [vmem:[%s0 + $0x10] sm:$0xff]
  %v30 = vld [vmem:[%s0 + $0x18] sm:$0xff]
  %v31 = vpack.c.bf16 %v28, %v27
  %v32 = vpack.c.bf16 %v30, %v29
  %v33 = vld [vmem:[%s1] sm:$0xf]
  %v34 = vld [vmem:[%s1 + $0x4] sm:$0xf]
  %v35 = vld [vmem:[%s2] sm:$0x1]
  %v37 = vlaneseq
  %v38 = vshrl.u32 %v37, 7
  %v39 = vsub.s32 0, %v38
  %v40 = vrot.slane %v35, %v39
  %v44 = vunpack.c.l.b16 %v33
  %v45 = vunpack.c.l.b16 %v34
  %v46 = vpack.c.b16 %v45, %v44
  %vm48 = vcmask 130048
  %v50 = vsel %vm48, %v31, 0
  %v53 = vsel %vm48, %v32, 0
  %55 = vmatprep.subr.bf16.mxu0 0
  %56 = vmatpush1.bf16.msra.mxu0 %v46
  %57 = vmatprep.subr.bf16.mxu0 0
  %58 = vmatpush1.bf16.msra.mxu0 0
  %59 = vmatprep.subr.bf16.mxu0 0
  %60 = vmatpush1.bf16.msra.mxu0 0
  %61 = vmatprep.subr.bf16.mxu0 0
  %62 = vmatpush1.bf16.msra.mxu0 0
  %63 = vmatprep.subr.bf16.mxu0 0
  %64 = vmatpush1.bf16.msra.mxu0 0
  %65 = vmatprep.subr.bf16.mxu0 0
  %66 = vmatpush1.bf16.msra.mxu0 0
  %67 = vmatprep.subr.bf16.mxu0 0
  %68 = vmatpush1.bf16.msra.mxu0 0
  %69 = vmatprep.subr.bf16.mxu0 0
  %70 = vmatpush1.bf16.msra.mxu0 0
  %71 = vmatprep.subr.bf16.mxu0 0
  %72 = vmatpush1.bf16.msra.mxu0 0
  %73 = vmatprep.subr.bf16.mxu0 0
  %74 = vmatpush1.bf16.msra.mxu0 0
  %75 = vmatprep.subr.bf16.mxu0 0
  %76 = vmatpush1.bf16.msra.mxu0 0
  %77 = vmatprep.subr.bf16.mxu0 0
  %78 = vmatpush1.bf16.msra.mxu0 0
  %79 = vmatprep.subr.bf16.mxu0 0
  %80 = vmatpush1.bf16.msra.mxu0 0
  %81 = vmatprep.subr.bf16.mxu0 0
  %82 = vmatpush1.bf16.msra.mxu0 0
  %83 = vmatprep.subr.bf16.mxu0 0
  %84 = vmatpush1.bf16.msra.mxu0 0
  %85 = vmatprep.subr.bf16.mxu0 0
  %86 = vmatpush1.bf16.msra.mxu0 0
  %87 = vmatprep.mubr.bf16.mxu0 0
  %88 = vmatmul.mubr.bf16.gmra.mrb[0].mxu0 %v50
  %v89 = vpop.f32.mrb[0].mxu0
  %v90 = vadd.f32 %v40, %v89
  %v91 = vpop.f32.mrb[0].mxu0
  %v92 = vpop.f32.mrb[0].mxu0
  %v93 = vadd.f32 %v40, %v92
  %v94 = vpop.f32.mrb[0].mxu0
  %95 = vmatprep.mubr.bf16.mxu0 0
  %96 = vmatmul.mubr.bf16.gmra.mrb[0].mxu0 %v53
  %v97 = vpop.f32.mrb[0].mxu0
  %v98 = vadd.f32 %v40, %v97
  %v99 = vpop.f32.mrb[0].mxu0
  %v100 = vpop.f32.mrb[0].mxu0
  %v101 = vadd.f32 %v40, %v100
  %v102 = vpop.f32.mrb[0].mxu0
  %103 = vdwg.mxu0
  %v104 = vmax.f32 %v90, 0.0
  %v105 = vmax.f32 %v93, 0.0
  %v106 = vmax.f32 %v98, 0.0
  %v107 = vmax.f32 %v101, 0.0
  %v108 = vpack.c.bf16 %v105, %v104
  %v109 = vpack.c.bf16 %v107, %v106
  %v110 = vld [vmem:[%s3] sm:$0xf]
  %v111 = vld [vmem:[%s3 + $0x4] sm:$0xf]
  %v112 = vld [vmem:[%s3 + $0x8] sm:$0xf]
  %v113 = vld [vmem:[%s3 + $0xc] sm:$0xf]
  %v114 = vld [vmem:[%s4] sm:$0x1]
  %v116 = vlaneseq
  %v117 = vshrl.u32 %v116, 7
  %v118 = vsub.s32 0, %v117
  %v119 = vrot.slane %v114, %v118
  %v125 = vunpack.c.l.b16 %v110
  %v126 = vunpack.c.l.b16 %v111
  %v127 = vunpack.c.l.b16 %v112
  %v128 = vunpack.c.l.b16 %v113
  %v129 = vpack.c.b16 %v126, %v125
  %v130 = vpack.c.b16 %v128, %v127
  %vm133 = vcmask 261120
  %v135 = vsel %vm133, %v108, 0
  %v138 = vsel %vm133, %v109, 0
  %140 = vmatprep.subr.bf16.mxu0 0
  %141 = vmatpush1.bf16.msra.mxu0 %v129
  %142 = vmatprep.subr.bf16.mxu0 0
  %143 = vmatpush1.bf16.msra.mxu0 %v130
  %144 = vmatprep.subr.bf16.mxu0 0
  %145 = vmatpush1.bf16.msra.mxu0 0
  %146 = vmatprep.subr.bf16.mxu0 0
  %147 = vmatpush1.bf16.msra.mxu0 0
  %148 = vmatprep.subr.bf16.mxu0 0
  %149 = vmatpush1.bf16.msra.mxu0 0
  %150 = vmatprep.subr.bf16.mxu0 0
  %151 = vmatpush1.bf16.msra.mxu0 0
  %152 = vmatprep.subr.bf16.mxu0 0
  %153 = vmatpush1.bf16.msra.mxu0 0
  %154 = vmatprep.subr.bf16.mxu0 0
  %155 = vmatpush1.bf16.msra.mxu0 0
  %156 = vmatprep.subr.bf16.mxu0 0
  %157 = vmatpush1.bf16.msra.mxu0 0
  %158 = vmatprep.subr.bf16.mxu0 0
  %159 = vmatpush1.bf16.msra.mxu0 0
  %160 = vmatprep.subr.bf16.mxu0 0
  %161 = vmatpush1.bf16.msra.mxu0 0
  %162 = vmatprep.subr.bf16.mxu0 0
  %163 = vmatpush1.bf16.msra.mxu0 0
  %164 = vmatprep.subr.bf16.mxu0 0
  %165 = vmatpush1.bf16.msra.mxu0 0
  %166 = vmatprep.subr.bf16.mxu0 0
  %167 = vmatpush1.bf16.msra.mxu0 0
  %168 = vmatprep.subr.bf16.mxu0 0
  %169 = vmatpush1.bf16.msra.mxu0 0
  %170 = vmatprep.subr.bf16.mxu0 0
  %171 = vmatpush1.bf16.msra.mxu0 0
  %172 = vmatprep.mubr.bf16.mxu0 0
  %173 = vmatmul.mubr.bf16.gmra.mrb[0].mxu0 %v135
  %v174 = vpop.f32.mrb[0].mxu0
  %v175 = vadd.f32 %v119, %v174
  %v176 = vpop.f32.mrb[0].mxu0
  %v177 = vpop.f32.mrb[0].mxu0
  %v178 = vadd.f32 %v119, %v177
  %v179 = vpop.f32.mrb[0].mxu0
  %180 = vmatprep.mubr.bf16.mxu0 0
  %181 = vmatmul.mubr.bf16.gmra.mrb[0].mxu0 %v138
  %v182 = vpop.f32.mrb[0].mxu0
  %v183 = vadd.f32 %v119, %v182
  %v184 = vpop.f32.mrb[0].mxu0
  %v185 = vpop.f32.mrb[0].mxu0
  %v186 = vadd.f32 %v119, %v185
  %v187 = vpop.f32.mrb[0].mxu0
  %188 = vdwg.mxu0
  %v189 = vmax.f32 %v175, 0.0
  %v190 = vmax.f32 %v178, 0.0
  %v191 = vmax.f32 %v183, 0.0
  %v192 = vmax.f32 %v186, 0.0
  %v193 = vpack.c.bf16 %v190, %v189
  %v194 = vpack.c.bf16 %v192, %v191
  %v195 = vld [vmem:[%s5] sm:$0xf]
  %v196 = vld [vmem:[%s5 + $0x4] sm:$0xf]
  %v197 = vld [vmem:[%s5 + $0x8] sm:$0xf]
  %v198 = vld [vmem:[%s5 + $0xc] sm:$0xf]
  %v199 = vld [vmem:[%s6] sm:$0x1]
  %v201 = vlaneseq
  %v202 = vshrl.u32 %v201, 7
  %v203 = vsub.s32 0, %v202
  %v204 = vrot.slane %v199, %v203
  %v210 = vunpack.c.l.b16 %v195
  %v211 = vunpack.c.l.b16 %v196
  %v212 = vunpack.c.l.b16 %v197
  %v213 = vunpack.c.l.b16 %v198
  %v214 = vpack.c.b16 %v211, %v210
  %v215 = vpack.c.b16 %v213, %v212
  %v219 = vsel %vm133, %v193, 0
  %v222 = vsel %vm133, %v194, 0
  %224 = vmatprep.subr.bf16.mxu0 0
  %225 = vmatpush1.bf16.msra.mxu0 %v214
  %226 = vmatprep.subr.bf16.mxu0 0
  %227 = vmatpush1.bf16.msra.mxu0 %v215
  %228 = vmatprep.subr.bf16.mxu0 0
  %229 = vmatpush1.bf16.msra.mxu0 0
  %230 = vmatprep.subr.bf16.mxu0 0
  %231 = vmatpush1.bf16.msra.mxu0 0
  %232 = vmatprep.subr.bf16.mxu0 0
  %233 = vmatpush1.bf16.msra.mxu0 0
  %234 = vmatprep.subr.bf16.mxu0 0
  %235 = vmatpush1.bf16.msra.mxu0 0
  %236 = vmatprep.subr.bf16.mxu0 0
  %237 = vmatpush1.bf16.msra.mxu0 0
  %238 = vmatprep.subr.bf16.mxu0 0
  %239 = vmatpush1.bf16.msra.mxu0 0
  %240 = vmatprep.subr.bf16.mxu0 0
  %241 = vmatpush1.bf16.msra.mxu0 0
  %242 = vmatprep.subr.bf16.mxu0 0
  %243 = vmatpush1.bf16.msra.mxu0 0
  %244 = vmatprep.subr.bf16.mxu0 0
  %245 = vmatpush1.bf16.msra.mxu0 0
  %246 = vmatprep.subr.bf16.mxu0 0
  %247 = vmatpush1.bf16.msra.mxu0 0
  %248 = vmatprep.subr.bf16.mxu0 0
  %249 = vmatpush1.bf16.msra.mxu0 0
  %250 = vmatprep.subr.bf16.mxu0 0
  %251 = vmatpush1.bf16.msra.mxu0 0
  %252 = vmatprep.subr.bf16.mxu0 0
  %253 = vmatpush1.bf16.msra.mxu0 0
  %254 = vmatprep.subr.bf16.mxu0 0
  %255 = vmatpush1.bf16.msra.mxu0 0
  %256 = vmatprep.mubr.bf16.mxu0 0
  %257 = vmatmul.mubr.bf16.gmra.mrb[0].mxu0 %v219
  %v258 = vpop.f32.mrb[0].mxu0
  %v259 = vadd.f32 %v204, %v258
  %v260 = vpop.f32.mrb[0].mxu0
  %v261 = vpop.f32.mrb[0].mxu0
  %v262 = vadd.f32 %v204, %v261
  %v263 = vpop.f32.mrb[0].mxu0
  %264 = vmatprep.mubr.bf16.mxu0 0
  %265 = vmatmul.mubr.bf16.gmra.mrb[0].mxu0 %v222
  %v266 = vpop.f32.mrb[0].mxu0
  %v267 = vadd.f32 %v204, %v266
  %v268 = vpop.f32.mrb[0].mxu0
  %v269 = vpop.f32.mrb[0].mxu0
  %v270 = vadd.f32 %v204, %v269
  %v271 = vpop.f32.mrb[0].mxu0
  %272 = vdwg.mxu0
  %vm273 = vcmask 64512
  %274 = vst.msk [vmem:[%s7] sm:$0xff] %vm273, %v259
  %275 = vst.msk [vmem:[%s7 + $0x8] sm:$0xff] %vm273, %v262
  %276 = vst.msk [vmem:[%s7 + $0x10] sm:$0xff] %vm273, %v267
  %277 = vst.msk [vmem:[%s7 + $0x18] sm:$0xff] %vm273, %v270
  // Predicated region
  $region30: #{dqn_forward.1} parent=0 // pred_check
    _
  $region31: #{dqn_forward.1} parent=0 // pred_check_branch
    %279 = sbr.rel (0) target = $region33
  $region32: #{dqn_forward.1} parent=0 // pred_region
    _
  $region33: #{dqn_forward.1} parent=0 // pred_fallthru
    _
  // Predicated region
  $region34: #{dqn_forward.1} parent=0 // pred_check
    _
  $region35: #{dqn_forward.1} parent=0 // pred_check_branch
    %281 = sbr.rel (0) target = $region37
  $region36: #{dqn_forward.1} parent=0 // pred_region
    _
  $region37: #{dqn_forward.1} parent=0 // pred_fallthru
    _

</llo_original>
